<compile_context>
chip_gen: v7x
topology: tpu7x:2x2x1
jax: 0.10.0
libtpu: 0.0.40
codegen_flags: <defaults>
</compile_context>

<pallas_src>
import jax
import jax.numpy as jnp
from jax import lax
from jax.experimental import pallas as pl
from jax.experimental.pallas import tpu as pltpu


def _make_bce_partial_kernel(tm, batch, needs_mask):
    def kernel(s1_ref, s2_ref, lbl_ref, out_ref):
        # Cast to f32 *inside* the kernel (cheap VPU cast, halves HBM traffic
        # for bf16 inputs vs. a wrapper-side astype).
        s1 = s1_ref[...].astype(jnp.float32)
        s2 = s2_ref[...].astype(jnp.float32)
        y = lbl_ref[...].astype(jnp.float32)

        def bce(p):
            # PyTorch BCELoss clamps log terms at -100 for numerical safety.
            logp = jnp.maximum(jnp.log(p), -100.0)
            log1mp = jnp.maximum(jnp.log(1.0 - p), -100.0)
            return -(y * logp + (1.0 - y) * log1mp)

        loss = bce(s1) + bce(s2)

        if needs_mask:
            # Zero out padded rows of a ragged last tile.
            rows = pl.program_id(0) * tm + lax.broadcasted_iota(
                jnp.int32, loss.shape, 0)
            loss = jnp.where(rows < batch, loss, 0.0)

        # Sublane-only reduce -> lane-dense (1, D) partial; the final lane
        # reduce and division by B are done outside the kernel.
        d = loss.shape[-1]
        out_ref[...] = jnp.sum(loss, axis=0, keepdims=True).reshape(1, 1, d)

    return kernel


def criterion_init_forward(scores1, scores2, labels, *, tile_bytes=2 * 1024 * 1024):
    """Pallas TPU implementation of criterion_init.forward (BCELoss reduction='none')."""
    assert scores1.shape == scores2.shape == labels.shape
    assert scores1.ndim == 2
    B, D = scores1.shape
    itemsize = max(jnp.dtype(scores1.dtype).itemsize,
                   jnp.dtype(scores2.dtype).itemsize,
                   jnp.dtype(labels.dtype).itemsize)

    # Row-tile sizing: ~tile_bytes per input tile, rows a multiple of 8 so the
    # (8, 128) block rule holds; full-extent block if the whole batch fits.
    budget_rows = max(8, (tile_bytes // max(1, D * itemsize)) // 8 * 8)
    tm = B if budget_rows >= B else budget_rows
    grid = pl.cdiv(B, tm)
    needs_mask = (B % tm) != 0

    kernel = _make_bce_partial_kernel(tm, B, needs_mask)

    partials = pl.pallas_call(
        kernel,
        out_shape=jax.ShapeDtypeStruct((grid, 1, D), jnp.float32),
        grid_spec=pltpu.PrefetchScalarGridSpec(
            num_scalar_prefetch=0,
            grid=(grid,),
            in_specs=[
                pl.BlockSpec((tm, D), lambda i: (i, 0)),
                pl.BlockSpec((tm, D), lambda i: (i, 0)),
                pl.BlockSpec((tm, D), lambda i: (i, 0)),
            ],
            out_specs=pl.BlockSpec((1, 1, D), lambda i: (i, 0, 0)),
        ),
        compiler_params=pltpu.CompilerParams(
            dimension_semantics=("parallel",),
        ),
        cost_estimate=pl.CostEstimate(
            flops=8 * B * D,
            transcendentals=4 * B * D,
            bytes_accessed=3 * B * D * itemsize + grid * D * 4,
        ),
    )(scores1, scores2, labels)

    # Tiny cross-tile / cross-lane reduce + scale by precomputed 1/B.
    return jnp.sum(partials) * jnp.float32(1.0 / B)


def _reference(scores1, scores2, labels):
    s1 = scores1.astype(jnp.float32)
    s2 = scores2.astype(jnp.float32)
    y = labels.astype(jnp.float32)

    def bce(p):
        logp = jnp.maximum(jnp.log(p), -100.0)
        log1mp = jnp.maximum(jnp.log(1.0 - p), -100.0)
        return -(y * logp + (1.0 - y) * log1mp)

    return jnp.sum(bce(s1) + bce(s2)) / scores1.shape[0]


if __name__ == "__main__":
    key = jax.random.PRNGKey(0)

    # Case 1: small f32, single full-extent tile.
    k1, k2, k3, key = jax.random.split(key, 4)
    B, D = 8, 128
    s1 = jax.nn.sigmoid(jax.random.normal(k1, (B, D), jnp.float32))
    s2 = jax.nn.sigmoid(jax.random.normal(k2, (B, D), jnp.float32))
    y = jax.random.bernoulli(k3, 0.5, (B, D)).astype(jnp.float32)
    out = jax.block_until_ready(criterion_init_forward(s1, s2, y))
    ref = _reference(s1, s2, y)
    assert jnp.allclose(out, ref, rtol=1e-5, atol=1e-5), (out, ref)

    # Case 2: force a multi-tile grid with a masked (ragged) last tile.
    k1, k2, k3, key = jax.random.split(key, 4)
    B, D = 20, 256
    s1 = jax.nn.sigmoid(jax.random.normal(k1, (B, D), jnp.float32))
    s2 = jax.nn.sigmoid(jax.random.normal(k2, (B, D), jnp.float32))
    y = jax.random.bernoulli(k3, 0.5, (B, D)).astype(jnp.float32)
    out = jax.block_until_ready(
        criterion_init_forward(s1, s2, y, tile_bytes=8 * D * 4))
    ref = _reference(s1, s2, y)
    assert jnp.allclose(out, ref, rtol=1e-5, atol=1e-5), (out, ref)

    # Case 3: bf16 inputs — cast happens inside the kernel.
    k1, k2, k3, key = jax.random.split(key, 4)
    B, D = 16, 128
    s1 = jax.nn.sigmoid(jax.random.normal(k1, (B, D), jnp.float32)).astype(jnp.bfloat16)
    s2 = jax.nn.sigmoid(jax.random.normal(k2, (B, D), jnp.float32)).astype(jnp.bfloat16)
    y = jax.random.bernoulli(k3, 0.5, (B, D)).astype(jnp.bfloat16)
    out = jax.block_until_ready(criterion_init_forward(s1, s2, y))
    ref = _reference(s1, s2, y)
    assert jnp.allclose(out, ref, rtol=2e-3, atol=2e-3), (out, ref)

    print("KERNEL_OK")
</pallas_src>

<mosaic_0001>
module attributes {stable_mosaic.version = 11 : i64} {
  func.func @kernel(%arg0: i32, %arg1: memref<8x128xf32, #tpu.memory_space<vmem>>, %arg2: memref<8x128xf32, #tpu.memory_space<vmem>>, %arg3: memref<8x128xf32, #tpu.memory_space<vmem>>, %arg4: memref<1x1x128xf32, #tpu.memory_space<vmem>>) attributes {dimension_semantics = [#tpu.dimension_semantics<parallel>], iteration_bounds = array<i64: 1>, scalar_prefetch = 0 : i64, scratch_operands = 0 : i64, tpu.core_type = #tpu.core_type<tc>, window_params = [{transform_indices = @transform_0, window_bounds = array<i64: 8, 128>}, {transform_indices = @transform_1, window_bounds = array<i64: 8, 128>}, {transform_indices = @transform_2, window_bounds = array<i64: 8, 128>}, {transform_indices = @transform_3, window_bounds = array<i64: 1, 1, 128>}]} {
    %c0 = arith.constant 0 : index
    %c0_0 = arith.constant 0 : index
    %0 = vector.load %arg1[%c0, %c0_0] : memref<8x128xf32, #tpu.memory_space<vmem>>, vector<8x128xf32>
    %c0_1 = arith.constant 0 : index
    %c0_2 = arith.constant 0 : index
    %1 = vector.load %arg2[%c0_1, %c0_2] : memref<8x128xf32, #tpu.memory_space<vmem>>, vector<8x128xf32>
    %c0_3 = arith.constant 0 : index
    %c0_4 = arith.constant 0 : index
    %2 = vector.load %arg3[%c0_3, %c0_4] : memref<8x128xf32, #tpu.memory_space<vmem>>, vector<8x128xf32>
    %3 = math.log %0 : vector<8x128xf32>
    %cst = arith.constant -1.000000e+02 : f32
    %4 = vector.broadcast %cst : f32 to vector<8x128xf32>
    %5 = arith.maximumf %3, %4 : vector<8x128xf32>
    %cst_5 = arith.constant 1.000000e+00 : f32
    %6 = vector.broadcast %cst_5 : f32 to vector<8x128xf32>
    %7 = arith.subf %6, %0 : vector<8x128xf32>
    %8 = math.log %7 : vector<8x128xf32>
    %cst_6 = arith.constant -1.000000e+02 : f32
    %9 = vector.broadcast %cst_6 : f32 to vector<8x128xf32>
    %10 = arith.maximumf %8, %9 : vector<8x128xf32>
    %11 = arith.mulf %2, %5 : vector<8x128xf32>
    %cst_7 = arith.constant 1.000000e+00 : f32
    %12 = vector.broadcast %cst_7 : f32 to vector<8x128xf32>
    %13 = arith.subf %12, %2 : vector<8x128xf32>
    %14 = arith.mulf %13, %10 : vector<8x128xf32>
    %15 = arith.addf %11, %14 : vector<8x128xf32>
    %cst_8 = arith.constant 0.000000e+00 : f32
    %16 = vector.broadcast %cst_8 : f32 to vector<8x128xf32>
    %17 = arith.subf %16, %15 : vector<8x128xf32>
    %18 = math.log %1 : vector<8x128xf32>
    %cst_9 = arith.constant -1.000000e+02 : f32
    %19 = vector.broadcast %cst_9 : f32 to vector<8x128xf32>
    %20 = arith.maximumf %18, %19 : vector<8x128xf32>
    %cst_10 = arith.constant 1.000000e+00 : f32
    %21 = vector.broadcast %cst_10 : f32 to vector<8x128xf32>
    %22 = arith.subf %21, %1 : vector<8x128xf32>
    %23 = math.log %22 : vector<8x128xf32>
    %cst_11 = arith.constant -1.000000e+02 : f32
    %24 = vector.broadcast %cst_11 : f32 to vector<8x128xf32>
    %25 = arith.maximumf %23, %24 : vector<8x128xf32>
    %26 = arith.mulf %2, %20 : vector<8x128xf32>
    %cst_12 = arith.constant 1.000000e+00 : f32
    %27 = vector.broadcast %cst_12 : f32 to vector<8x128xf32>
    %28 = arith.subf %27, %2 : vector<8x128xf32>
    %29 = arith.mulf %28, %25 : vector<8x128xf32>
    %30 = arith.addf %26, %29 : vector<8x128xf32>
    %cst_13 = arith.constant 0.000000e+00 : f32
    %31 = vector.broadcast %cst_13 : f32 to vector<8x128xf32>
    %32 = arith.subf %31, %30 : vector<8x128xf32>
    %33 = arith.addf %17, %32 : vector<8x128xf32>
    %cst_14 = arith.constant dense<0.000000e+00> : vector<128xf32>
    %34 = vector.multi_reduction <add>, %33, %cst_14 [0] : vector<8x128xf32> to vector<128xf32>
    %35 = vector.shape_cast %34 : vector<128xf32> to vector<1x128xf32>
    %36 = vector.shape_cast %35 : vector<1x128xf32> to vector<1x1x128xf32>
    %c0_15 = arith.constant 0 : index
    %c0_16 = arith.constant 0 : index
    %c0_17 = arith.constant 0 : index
    %37 = vector.load %arg4[%c0_15, %c0_16, %c0_17] : memref<1x1x128xf32, #tpu.memory_space<vmem>>, vector<1x1x128xf32>
    tpu.vector_store %arg4[%c0_15, %c0_16, %c0_17], %36 {strides = array<i32>} : memref<1x1x128xf32, #tpu.memory_space<vmem>>, vector<1x1x128xf32>,
    return
  }
  func.func @transform_0(%arg0: i32) -> (i32, i32) {
    %c0_i32 = arith.constant 0 : i32
    %c0_i32_0 = arith.constant 0 : i32
    return %arg0, %c0_i32 : i32, i32
  }
  func.func @transform_1(%arg0: i32) -> (i32, i32) {
    %c0_i32 = arith.constant 0 : i32
    %c0_i32_0 = arith.constant 0 : i32
    return %arg0, %c0_i32 : i32, i32
  }
  func.func @transform_2(%arg0: i32) -> (i32, i32) {
    %c0_i32 = arith.constant 0 : i32
    %c0_i32_0 = arith.constant 0 : i32
    return %arg0, %c0_i32 : i32, i32
  }
  func.func @transform_3(%arg0: i32) -> (i32, i32, i32) {
    %c0_i32 = arith.constant 0 : i32
    %c0_i32_0 = arith.constant 0 : i32
    %c0_i32_1 = arith.constant 0 : i32
    return %arg0, %c0_i32, %c0_i32_0 : i32, i32, i32
  }
}

</mosaic_0001>

<llo_original>
// kernel: tpu_custom_call.1
$region0: #{tpu_custom_call.1}
  #allocation0 [shape = 'u32[]', space=smem, size = 0x4, offset = 0x4, fixed_abs, tag = 'smem constant byte address 0x4 - core index']
  #allocation1 [shape = 'u32[144,128]{1,0:T(1,128)}', space=vmem, size = 0x12000, scoped, tag = 'internal scratch']
  %s0 = inlined_call_operand.hbm [shape: f32[8,128], index: 0, kind: input, shape index: {}]
  %s1 = inlined_call_operand.hbm [shape: f32[8,128], index: 1, kind: input, shape index: {}]
  %s2 = inlined_call_operand.hbm [shape: f32[8,128], index: 2, kind: input, shape index: {}]
  %s3 = inlined_call_operand.hbm [shape: f32[1,1,128], index: 3, kind: output, shape index: {}]
  %s4 = sld [smem:[#allocation0]]
  $region34: #{tpu_custom_call.1} parent=0
    _
  %s6 = ssub.s32 1, %s4
  %s7 = scalar_select 0, %s6, %s4
  $region1: #{tpu_custom_call.1} parent=0
    #allocation2 [shape = 'u8[4096]{0}', space=vmem, size = 0x1000, scoped, tag = 'input window, operand 0, single buffered']
    #allocation3 [shape = 's32[1]{0}', space=sflag, size = 0x4, scoped, tag = 'scoped memory for tpu_custom_call.1']
    #allocation4 [shape = 's32[1]{0}', space=sflag, size = 0x4, scoped, tag = 'scoped memory for tpu_custom_call.1']
    #allocation5 [shape = 'u8[4096]{0}', space=vmem, size = 0x1000, scoped, tag = 'input window, operand 1, single buffered']
    #allocation6 [shape = 's32[1]{0}', space=sflag, size = 0x4, scoped, tag = 'scoped memory for tpu_custom_call.1']
    #allocation7 [shape = 'u8[4096]{0}', space=vmem, size = 0x1000, scoped, tag = 'input window, operand 2, single buffered']
    #allocation8 [shape = 'u8[512]{0}', space=vmem, size = 0x400, scoped, tag = 'output window, operand 0, single buffered']
    %8 = vsyncpa [#allocation3], 0
    %9 = vsyncpa [#allocation6], 0
    %10 = vsyncpa [#allocation4], 0
    // Predicated region
    $region2: #{tpu_custom_call.1} parent=1 // pred_check
      _
    $region3: #{tpu_custom_call.1} parent=1 // pred_check_branch
      %12 = sbr.rel (0) target = $region5
    $region4: #{tpu_custom_call.1} parent=1 // pred_region
      %s14 = ssub.s32 128, 128
      %15 = vsyncadd [#allocation3], %s14
      %s17 = sshll.u32 [#allocation2], 4
      %s18 = int_to_ptr.vmem [resolvable:$true] %s17
      %20 = dma.hbm_to_vmem [thread:$0]  %s0, 128, %s18, [#allocation3]
    $region5: #{tpu_custom_call.1} parent=1 // pred_fallthru
      _
    // Predicated region
    $region6: #{tpu_custom_call.1} parent=1 // pred_check
      _
    $region7: #{tpu_custom_call.1} parent=1 // pred_check_branch
      %22 = sbr.rel (0) target = $region9
    $region8: #{tpu_custom_call.1} parent=1 // pred_region
      %s24 = ssub.s32 128, 128
      %25 = vsyncadd [#allocation6], %s24
      %s27 = sshll.u32 [#allocation5], 4
      %s28 = int_to_ptr.vmem [resolvable:$true] %s27
      %30 = dma.hbm_to_vmem [thread:$0]  %s1, 128, %s28, [#allocation6]
    $region9: #{tpu_custom_call.1} parent=1 // pred_fallthru
      _
    // Predicated region
    $region10: #{tpu_custom_call.1} parent=1 // pred_check
      _
    $region11: #{tpu_custom_call.1} parent=1 // pred_check_branch
      %32 = sbr.rel (0) target = $region13
    $region12: #{tpu_custom_call.1} parent=1 // pred_region
      %s34 = ssub.s32 128, 128
      %35 = vsyncadd [#allocation6], %s34
      %s37 = sshll.u32 [#allocation7], 4
      %s38 = int_to_ptr.vmem [resolvable:$true] %s37
      %40 = dma.hbm_to_vmem [thread:$0]  %s2, 128, %s38, [#allocation6]
    $region13: #{tpu_custom_call.1} parent=1 // pred_fallthru
      _
    // Predicated region
    $region14: #{tpu_custom_call.1} parent=1 // pred_check
      _
    $region15: #{tpu_custom_call.1} parent=1 // pred_check_branch
      %42 = sbr.rel (0) target = $region17
    $region16: #{tpu_custom_call.1} parent=1 // pred_region
      %43 = dma.done [#allocation3], 128
    $region17: #{tpu_custom_call.1} parent=1 // pred_fallthru
      _
    // Predicated region
    $region18: #{tpu_custom_call.1} parent=1 // pred_check
      _
    $region19: #{tpu_custom_call.1} parent=1 // pred_check_branch
      %45 = sbr.rel (0) target = $region21
    $region20: #{tpu_custom_call.1} parent=1 // pred_region
      %46 = dma.done [#allocation6], 128
    $region21: #{tpu_custom_call.1} parent=1 // pred_fallthru
      _
    // Predicated region
    $region22: #{tpu_custom_call.1} parent=1 // pred_check
      _
    $region23: #{tpu_custom_call.1} parent=1 // pred_check_branch
      %48 = sbr.rel (0) target = $region25
    $region24: #{tpu_custom_call.1} parent=1 // pred_region
      %49 = dma.done [#allocation6], 128
    $region25: #{tpu_custom_call.1} parent=1 // pred_fallthru
      _
    %v50 = vld [vmem:[#allocation2] sm:$0xff]
    %v51 = vld [vmem:[#allocation5] sm:$0xff]
    %v52 = vld [vmem:[#allocation7] sm:$0xff]
    %v53 = vlog2.pop %v50
    %v54 = vmul.f32 %v53, 0.6931472
    %v55 = vmax.f32 %v54, -100.0
    %v56 = vsub.f32 1.0, %v50
    %v57 = vlog2.pop %v56
    %v58 = vmul.f32 %v57, 0.6931472
    %v59 = vmax.f32 %v58, -100.0
    %v60 = vmul.f32 %v52, %v55
    %v61 = vsub.f32 1.0, %v52
    %v62 = vmul.f32 %v61, %v59
    %v63 = vadd.f32 %v60, %v62
    %v64 = vsub.f32 0.0, %v63
    %v65 = vlog2.pop %v51
    %v66 = vmul.f32 %v65, 0.6931472
    %v67 = vmax.f32 %v66, -100.0
    %v68 = vsub.f32 1.0, %v51
    %v69 = vlog2.pop %v68
    %v70 = vmul.f32 %v69, 0.6931472
    %v71 = vmax.f32 %v70, -100.0
    %v72 = vmul.f32 %v52, %v67
    %v73 = vmul.f32 %v61, %v71
    %v74 = vadd.f32 %v72, %v73
    %v75 = vsub.f32 0.0, %v74
    %v76 = vadd.f32 %v64, %v75
    %v77 = vrot.slane %v76, 4
    %v78 = vadd.f32 %v76, %v77
    %v79 = vrot.slane %v78, 2
    %v80 = vadd.f32 %v78, %v79
    %v81 = vrot.slane %v80, 1
    %v82 = vadd.f32 %v80, %v81
    %83 = vst [vmem:[#allocation8] sm:$0x1] %v82
    // Predicated region
    $region26: #{tpu_custom_call.1} parent=1 // pred_check
      _
    $region27: #{tpu_custom_call.1} parent=1 // pred_check_branch
      %85 = sbr.rel (0) target = $region29
    $region28: #{tpu_custom_call.1} parent=1 // pred_region
      %s87 = ssub.s32 16, 16
      %88 = vsyncadd [#allocation4], %s87
      %s90 = sshll.u32 [#allocation8], 4
      %s91 = int_to_ptr.vmem [resolvable:$true] %s90
      %93 = dma.vmem_to_hbm [thread:$0]  %s91, 16, %s3, [#allocation4]
    $region29: #{tpu_custom_call.1} parent=1 // pred_fallthru
      _
    // Predicated region
    $region30: #{tpu_custom_call.1} parent=1 // pred_check
      _
    $region31: #{tpu_custom_call.1} parent=1 // pred_check_branch
      %95 = sbr.rel (0) target = $region33
    $region32: #{tpu_custom_call.1} parent=1 // pred_region
      %96 = dma.done [#allocation4], 16
    $region33: #{tpu_custom_call.1} parent=1 // pred_fallthru
      _
    %97 = vsyncpa [#allocation3], 1
    %98 = vsyncpa [#allocation6], 1
    %99 = vsyncpa [#allocation4], 1

</llo_original>
